<compile_context>
chip_gen: v7x
topology: tpu7x:2x2x1
jax: 0.10.0
libtpu: 0.0.40
codegen_flags: <defaults>
</compile_context>

<pallas_src>
import math

import jax
import jax.numpy as jnp
from jax.experimental import pallas as pl
from jax.experimental.pallas import tpu as pltpu


def _cdiv(a, b):
    return -(-a // b)


def _round_up(x, m):
    return _cdiv(x, m) * m


def _round_down(x, m):
    return (x // m) * m


def _chip_defaults():
    """(core_split, target_tile_bytes, vmem_limit_bytes) per TPU generation."""
    try:
        kind = jax.devices()[0].device_kind.lower()
    except Exception:
        kind = ""
    if "v7" in kind or "7x" in kind:
        # 2 TensorCores / chip, only 64 MiB VMEM per TC: 2 in x 2 buf x 8 MiB.
        return 2, 8 << 20, 48 << 20
    if "v6" in kind:
        # 1 TC, 128 MiB physical VMEM: generous tiles amortize step overhead.
        return 1, 8 << 20, 64 << 20
    if "v5" in kind:
        return 1, 4 << 20, 32 << 20
    return 1, 4 << 20, 32 << 20


def _make_mse_kernel(tile_rows, steps, valid_rows, need_mask):
    def kernel(p_ref, b_ref, o_ref):
        c = pl.program_id(0)
        i = pl.program_id(1)

        @pl.when(i == 0)
        def _():
            o_ref[...] = jnp.zeros_like(o_ref)

        p = p_ref[...].astype(jnp.float32)
        b = b_ref[...].astype(jnp.float32)
        d = p - b
        sq = d * d

        if need_mask:
            # Zero rows past the end of the (un-padded) input.  Garbage from
            # the partial final block (and from fully out-of-range, clamped
            # blocks on the last core) then contributes nothing.
            row_start = (c * steps + i) * tile_rows
            row_ids = jax.lax.broadcasted_iota(jnp.int32, sq.shape, 0) + row_start
            sq = jnp.where(row_ids < valid_rows, sq, 0.0)

        t, w = sq.shape
        # Layout-preserving sublane-group fold: pure VPU vreg adds, no XLU
        # cross-lane reduce per step.  Accumulate straight into the resident
        # output block.
        o_ref[...] += sq.reshape(t // 8, 8, w).sum(axis=0)

    return kernel


def mse_loss(pruned_embeddings, base_embeddings, *,
             core_split=None, target_tile_bytes=None, vmem_limit_bytes=None,
             min_pallas_elements=1 << 20):
    """Pallas equivalent of torch.mean((pruned - base) ** 2).  Returns f32."""
    assert pruned_embeddings.shape == base_embeddings.shape
    assert pruned_embeddings.dtype == base_embeddings.dtype

    n_total = math.prod(pruned_embeddings.shape)
    dtype = pruned_embeddings.dtype
    itemsize = jnp.dtype(dtype).itemsize

    def _jnp_fallback():
        d = (pruned_embeddings.astype(jnp.float32)
             - base_embeddings.astype(jnp.float32))
        return jnp.mean(d * d)

    # Small inputs: the pallas_call launch + final reduce dwarf the work.
    if n_total < max(min_pallas_elements, 1):
        return _jnp_fallback()

    # Lane-dense streaming layout: flatten and fold to (rows, lane_width).
    lane_width = next((lw for lw in (512, 256, 128) if n_total % lw == 0), None)
    if lane_width is None:
        # Not a multiple of 128 lanes: padding would force a full HBM copy of
        # both inputs, so let XLA's fused reduce handle this (rare) case.
        return _jnp_fallback()

    chip_core_split, chip_tile_bytes, chip_vmem = _chip_defaults()
    if core_split is None:
        core_split = chip_core_split
    if target_tile_bytes is None:
        target_tile_bytes = chip_tile_bytes
    if vmem_limit_bytes is None:
        vmem_limit_bytes = chip_vmem

    rows = n_total // lane_width
    # Sublane packing granularity: 8 rows (4B dtypes), 16 (bf16), 32 (1B).
    row_align = max(8, 32 // itemsize)

    # Tile sized by bytes (per input per step), capped by what is needed.
    cap_rows = max(row_align,
                   _round_down(target_tile_bytes // (lane_width * itemsize),
                               row_align))
    tile_rows = min(cap_rows, _round_up(_cdiv(rows, core_split), row_align))

    nblocks = _cdiv(rows, tile_rows)
    steps = _cdiv(nblocks, core_split)
    need_mask = (core_split * steps * tile_rows) != rows

    p2d = pruned_embeddings.reshape(rows, lane_width)
    b2d = base_embeddings.reshape(rows, lane_width)

    def in_map(c, i):
        # Core c owns a contiguous range of row-tiles; clamp so a fully
        # out-of-range step (last core, ragged split) re-reads a valid block.
        # Its contribution is masked to zero inside the kernel.
        return (jnp.minimum(c * steps + i, nblocks - 1), 0)

    kernel = _make_mse_kernel(tile_rows, steps, rows, need_mask)

    partials = pl.pallas_call(
        kernel,
        out_shape=jax.ShapeDtypeStruct((core_split * 8, lane_width), jnp.float32),
        grid_spec=pltpu.PrefetchScalarGridSpec(
            num_scalar_prefetch=0,
            grid=(core_split, steps),
            in_specs=[
                pl.BlockSpec((tile_rows, lane_width), in_map),
                pl.BlockSpec((tile_rows, lane_width), in_map),
            ],
            out_specs=pl.BlockSpec((8, lane_width), lambda c, i: (c, 0)),
        ),
        compiler_params=pltpu.CompilerParams(
            dimension_semantics=("parallel", "arbitrary"),
            vmem_limit_bytes=vmem_limit_bytes,
        ),
        cost_estimate=pl.CostEstimate(
            flops=3 * n_total,
            transcendentals=0,
            bytes_accessed=2 * n_total * itemsize
            + core_split * 8 * lane_width * 4,
        ),
    )(p2d, b2d)

    # Tiny final cross-lane reduce + mean scaling on the (core_split*8, lane)
    # f32 partial sums (a few KiB).
    return jnp.sum(partials) * jnp.float32(1.0 / n_total)


if __name__ == "__main__":
    # TODO(synk): requires_grad_() autograd bookkeeping has no forward-pass
    # equivalent; only the loss value is computed here.
    key = jax.random.PRNGKey(0)
    k1, k2, k3, k4 = jax.random.split(key, 4)

    def ref_mse(p, b):
        pf = p.astype(jnp.float32)
        bf = b.astype(jnp.float32)
        return jnp.mean((pf - bf) ** 2)

    # 1) Small embedding tensors [batch=2, seq=8, hidden=128], forced through
    #    the Pallas path (rows < one tile -> exercises the ragged-row mask).
    pruned = jax.random.normal(k1, (2, 8, 128), dtype=jnp.float32)
    base = jax.random.normal(k2, (2, 8, 128), dtype=jnp.float32)
    loss = mse_loss(pruned, base, min_pallas_elements=0)
    jax.block_until_ready(loss)
    assert jnp.allclose(loss, ref_mse(pruned, base), rtol=1e-5, atol=1e-6), loss

    # 2) Default dispatch: small inputs take the fused-XLA fallback.
    loss_fb = mse_loss(pruned, base)
    jax.block_until_ready(loss_fb)
    assert jnp.allclose(loss_fb, ref_mse(pruned, base), rtol=1e-5, atol=1e-6)

    # 3) Ragged row count + forced core_split=2 + tiny tiles: exercises
    #    multi-step accumulation, block-index clamping and tail masking.
    p3 = jax.random.normal(k3, (4, 33, 128), dtype=jnp.float32)
    b3 = jax.random.normal(k4, (4, 33, 128), dtype=jnp.float32)
    loss3 = mse_loss(p3, b3, min_pallas_elements=0, core_split=2,
                     target_tile_bytes=16 * 1024)
    jax.block_until_ready(loss3)
    assert jnp.allclose(loss3, ref_mse(p3, b3), rtol=1e-5, atol=1e-6), loss3

    # 4) bf16 inputs stream at native width and are cast to f32 in-kernel.
    p4 = jax.random.normal(k1, (2, 64, 128), dtype=jnp.float32).astype(jnp.bfloat16)
    b4 = jax.random.normal(k2, (2, 64, 128), dtype=jnp.float32).astype(jnp.bfloat16)
    loss4 = mse_loss(p4, b4, min_pallas_elements=0, target_tile_bytes=32 * 1024)
    jax.block_until_ready(loss4)
    assert jnp.allclose(loss4, ref_mse(p4, b4), rtol=1e-2, atol=1e-3), loss4

    # 5) Size not a multiple of 128: dispatcher takes the fused-reduce path.
    p5 = jax.random.normal(k3, (3, 5, 96), dtype=jnp.float32)
    b5 = jax.random.normal(k4, (3, 5, 96), dtype=jnp.float32)
    loss5 = mse_loss(p5, b5, min_pallas_elements=0)
    jax.block_until_ready(loss5)
    assert jnp.allclose(loss5, ref_mse(p5, b5), rtol=1e-5, atol=1e-6), loss5

    print("KERNEL_OK")
</pallas_src>

<mosaic_0001>
module attributes {stable_mosaic.version = 11 : i64} {
  func.func @kernel(%arg0: i32, %arg1: i32, %arg2: memref<8x512xf32, #tpu.memory_space<vmem>>, %arg3: memref<8x512xf32, #tpu.memory_space<vmem>>, %arg4: memref<8x512xf32, #tpu.memory_space<vmem>>) attributes {dimension_semantics = [#tpu.dimension_semantics<parallel>, #tpu.dimension_semantics<arbitrary>], iteration_bounds = array<i64: 1, 1>, scalar_prefetch = 0 : i64, scratch_operands = 0 : i64, tpu.core_type = #tpu.core_type<tc>, window_params = [{transform_indices = @transform_0, window_bounds = array<i64: 8, 512>}, {transform_indices = @transform_1, window_bounds = array<i64: 8, 512>}, {transform_indices = @transform_2, window_bounds = array<i64: 8, 512>}]} {
    %c0_i32 = arith.constant 0 : i32
    %0 = arith.cmpi eq, %arg1, %c0_i32 : i32
    %1 = arith.extui %0 : i1 to i32
    %c0_i32_0 = arith.constant 0 : i32
    %2 = arith.cmpi ne, %1, %c0_i32_0 : i32
    scf.if %2 {
      %cst_9 = arith.constant 0.000000e+00 : f32
      %22 = vector.broadcast %cst_9 : f32 to vector<8x512xf32>
      %c0_10 = arith.constant 0 : index
      %c0_11 = arith.constant 0 : index
      %23 = vector.load %arg4[%c0_10, %c0_11] : memref<8x512xf32, #tpu.memory_space<vmem>>, vector<8x512xf32>
      tpu.vector_store %arg4[%c0_10, %c0_11], %22 {strides = array<i32>} : memref<8x512xf32, #tpu.memory_space<vmem>>, vector<8x512xf32>,
    } else {
    }
    %c0 = arith.constant 0 : index
    %c0_1 = arith.constant 0 : index
    %3 = vector.load %arg2[%c0, %c0_1] : memref<8x512xf32, #tpu.memory_space<vmem>>, vector<8x512xf32>
    %c0_2 = arith.constant 0 : index
    %c0_3 = arith.constant 0 : index
    %4 = vector.load %arg3[%c0_2, %c0_3] : memref<8x512xf32, #tpu.memory_space<vmem>>, vector<8x512xf32>
    %5 = arith.subf %3, %4 : vector<8x512xf32>
    %6 = arith.mulf %5, %5 : vector<8x512xf32>
    %c1_i32 = arith.constant 1 : i32
    %7 = arith.muli %arg0, %c1_i32 : i32
    %8 = arith.addi %7, %arg1 : i32
    %c8_i32 = arith.constant 8 : i32
    %9 = arith.muli %8, %c8_i32 : i32
    %10 = tpu.iota {dimensions = array<i32: 0>} : vector<8x512xi32>
    %11 = vector.broadcast %9 : i32 to vector<8x512xi32>
    %12 = arith.addi %10, %11 : vector<8x512xi32>
    %c4_i32 = arith.constant 4 : i32
    %13 = vector.broadcast %c4_i32 : i32 to vector<8x512xi32>
    %14 = arith.cmpi slt, %12, %13 : vector<8x512xi32>
    %cst = arith.constant 0.000000e+00 : f32
    %15 = vector.broadcast %cst : f32 to vector<8x512xf32>
    %16 = arith.select %14, %6, %15 : vector<8x512xi1>, vector<8x512xf32>
    %c0_4 = arith.constant 0 : index
    %c0_5 = arith.constant 0 : index
    %17 = vector.load %arg4[%c0_4, %c0_5] : memref<8x512xf32, #tpu.memory_space<vmem>>, vector<8x512xf32>
    %18 = vector.shape_cast %16 : vector<8x512xf32> to vector<1x8x512xf32>
    %cst_6 = arith.constant dense<0.000000e+00> : vector<8x512xf32>
    %19 = vector.multi_reduction <add>, %18, %cst_6 [0] : vector<1x8x512xf32> to vector<8x512xf32>
    %20 = arith.addf %17, %19 : vector<8x512xf32>
    %c0_7 = arith.constant 0 : index
    %c0_8 = arith.constant 0 : index
    %21 = vector.load %arg4[%c0_7, %c0_8] : memref<8x512xf32, #tpu.memory_space<vmem>>, vector<8x512xf32>
    tpu.vector_store %arg4[%c0_7, %c0_8], %20 {strides = array<i32>} : memref<8x512xf32, #tpu.memory_space<vmem>>, vector<8x512xf32>,
    return
  }
  func.func @transform_0(%arg0: i32, %arg1: i32) -> (i32, i32) {
    %c1_i32 = arith.constant 1 : i32
    %0 = arith.muli %arg0, %c1_i32 : i32
    %1 = arith.addi %0, %arg1 : i32
    %c0_i32 = arith.constant 0 : i32
    %2 = arith.minsi %1, %c0_i32 : i32
    %c0_i32_0 = arith.constant 0 : i32
    %c0_i32_1 = arith.constant 0 : i32
    return %2, %c0_i32_0 : i32, i32
  }
  func.func @transform_1(%arg0: i32, %arg1: i32) -> (i32, i32) {
    %c1_i32 = arith.constant 1 : i32
    %0 = arith.muli %arg0, %c1_i32 : i32
    %1 = arith.addi %0, %arg1 : i32
    %c0_i32 = arith.constant 0 : i32
    %2 = arith.minsi %1, %c0_i32 : i32
    %c0_i32_0 = arith.constant 0 : i32
    %c0_i32_1 = arith.constant 0 : i32
    return %2, %c0_i32_0 : i32, i32
  }
  func.func @transform_2(%arg0: i32, %arg1: i32) -> (i32, i32) {
    %c0_i32 = arith.constant 0 : i32
    %c0_i32_0 = arith.constant 0 : i32
    return %arg0, %c0_i32 : i32, i32
  }
}

</mosaic_0001>

<llo_original>
// kernel: tpu_custom_call.1
$region0: #{tpu_custom_call.1}
  #allocation0 [shape = 'u32[]', space=smem, size = 0x4, offset = 0x4, fixed_abs, tag = 'smem constant byte address 0x4 - core index']
  #allocation1 [shape = 'u32[144,128]{1,0:T(1,128)}', space=vmem, size = 0x12000, scoped, tag = 'internal scratch']
  %s0 = inlined_call_operand.hbm [shape: f32[4,512], index: 0, kind: input, shape index: {}]
  %s1 = inlined_call_operand.hbm [shape: f32[4,512], index: 1, kind: input, shape index: {}]
  %s2 = inlined_call_operand.hbm [shape: f32[8,512], index: 2, kind: output, shape index: {}]
  %s3 = sld [smem:[#allocation0]]
  $region30: #{tpu_custom_call.1} parent=0
    _
  %s5 = ssub.s32 1, %s3
  %s6 = scalar_select 0, %s5, %s3
  $region1: #{tpu_custom_call.1} parent=0
    #allocation2 [shape = 'u8[16384]{0}', space=vmem, size = 0x4000, scoped, tag = 'input window, operand 0, single buffered']
    #allocation3 [shape = 's32[1]{0}', space=sflag, size = 0x4, scoped, tag = 'scoped memory for tpu_custom_call.1']
    #allocation4 [shape = 's32[1]{0}', space=sflag, size = 0x4, scoped, tag = 'scoped memory for tpu_custom_call.1']
    #allocation5 [shape = 'u8[16384]{0}', space=vmem, size = 0x4000, scoped, tag = 'input window, operand 1, single buffered']
    #allocation6 [shape = 's32[1]{0}', space=sflag, size = 0x4, scoped, tag = 'scoped memory for tpu_custom_call.1']
    #allocation7 [shape = 'u8[16384]{0}', space=vmem, size = 0x4000, scoped, tag = 'output window, operand 0, single buffered']
    %7 = vsyncpa [#allocation3], 0
    %8 = vsyncpa [#allocation6], 0
    %9 = vsyncpa [#allocation4], 0
    // Predicated region
    $region2: #{tpu_custom_call.1} parent=1 // pred_check
      _
    $region3: #{tpu_custom_call.1} parent=1 // pred_check_branch
      %11 = sbr.rel (0) target = $region5
    $region4: #{tpu_custom_call.1} parent=1 // pred_region
      %s12 = sadd.s32 0, 0
      %p13 = scmp.lt.s32.totalorder %s12, 0
      %s14 = scalar_select %p13, %s12, 0
      %s15 = smul.u32 2, %s14
      %s16 = ssub.s32 1, %s15
      %s17 = smul.u32 64, %s16
      %s18 = smul.u32 %s17, 4
      %s20 = ssub.s32 512, %s18
      %21 = vsyncadd [#allocation3], %s20
      %p22 = scmp.ne.s32.totalorder 0, %s18
      %s23 = smul.addr %s15, 4
      %s24 = smul.addr %s23, 64
      %s25 = scalar_lea.hbm %s0, %s24
      %s26 = smul.u32 16, %s16
      %s27 = sshll.u32 [#allocation2], 4
      %s28 = int_to_ptr.vmem [resolvable:$true] %s27
      %s29 = sshll.u32 %s26, 4
      %33 = dma.hbm_to_vmem [thread:$0]  (%p22), %s25, %s29, %s28, [#allocation3], 256, 256, 16
    $region5: #{tpu_custom_call.1} parent=1 // pred_fallthru
      _
    // Predicated region
    $region6: #{tpu_custom_call.1} parent=1 // pred_check
      _
    $region7: #{tpu_custom_call.1} parent=1 // pred_check_branch
      %35 = sbr.rel (0) target = $region9
    $region8: #{tpu_custom_call.1} parent=1 // pred_region
      %s36 = sadd.s32 0, 0
      %p37 = scmp.lt.s32.totalorder %s36, 0
      %s38 = scalar_select %p37, %s36, 0
      %s39 = smul.u32 2, %s38
      %s40 = ssub.s32 1, %s39
      %s41 = smul.u32 64, %s40
      %s42 = smul.u32 %s41, 4
      %s44 = ssub.s32 512, %s42
      %45 = vsyncadd [#allocation6], %s44
      %p46 = scmp.ne.s32.totalorder 0, %s42
      %s47 = smul.addr %s39, 4
      %s48 = smul.addr %s47, 64
      %s49 = scalar_lea.hbm %s1, %s48
      %s50 = smul.u32 16, %s40
      %s51 = sshll.u32 [#allocation5], 4
      %s52 = int_to_ptr.vmem [resolvable:$true] %s51
      %s53 = sshll.u32 %s50, 4
      %57 = dma.hbm_to_vmem [thread:$0]  (%p46), %s49, %s53, %s52, [#allocation6], 256, 256, 16
    $region9: #{tpu_custom_call.1} parent=1 // pred_fallthru
      _
    // Predicated region
    $region10: #{tpu_custom_call.1} parent=1 // pred_check
      _
    $region11: #{tpu_custom_call.1} parent=1 // pred_check_branch
      %59 = sbr.rel (0) target = $region13
    $region12: #{tpu_custom_call.1} parent=1 // pred_region
      %60 = dma.done [#allocation3], 512
    $region13: #{tpu_custom_call.1} parent=1 // pred_fallthru
      _
    // Predicated region
    $region14: #{tpu_custom_call.1} parent=1 // pred_check
      _
    $region15: #{tpu_custom_call.1} parent=1 // pred_check_branch
      %62 = sbr.rel (0) target = $region17
    $region16: #{tpu_custom_call.1} parent=1 // pred_region
      %63 = dma.done [#allocation6], 512
    $region17: #{tpu_custom_call.1} parent=1 // pred_fallthru
      _
    %s64 = sadd.s32 0, 0
    %p65 = scmp.lt.s32.totalorder %s64, 0
    %s66 = scalar_select %p65, %s64, 0
    %s67 = smul.u32 2, %s66
    %s68 = ssub.s32 1, %s67
    %s69 = smul.u32 64, %s68
    %s70 = smul.u32 %s69, 4
    %s71 = sadd.s32 0, 0
    %p72 = scmp.lt.s32.totalorder %s71, 0
    %s73 = scalar_select %p72, %s71, 0
    %s74 = smul.u32 2, %s73
    %s75 = ssub.s32 1, %s74
    %s76 = smul.u32 64, %s75
    %s77 = smul.u32 %s76, 4
    %p78 = scmp.eq.s32.totalorder 0, 0
    // Predicated region
    $region18: #{tpu_custom_call.1} parent=1 // pred_check
      %p79 = pneg %p78
    $region19: #{tpu_custom_call.1} parent=1 // pred_check_branch
      %81 = sbr.rel (%p79) target = $region21
    $region20: #{tpu_custom_call.1} parent=1 // pred_region
      %82 = vst [vmem:[#allocation7] sm:$0xff] 0.0
      %83 = vst [vmem:[#allocation7 + $0x8] sm:$0xff] 0.0
      %84 = vst [vmem:[#allocation7 + $0x10] sm:$0xff] 0.0
      %85 = vst [vmem:[#allocation7 + $0x18] sm:$0xff] 0.0
    $region21: #{tpu_custom_call.1} parent=1 // pred_fallthru
      _
    %v86 = vld [vmem:[#allocation2] sm:$0xff]
    %v87 = vld [vmem:[#allocation2 + $0x8] sm:$0xff]
    %v88 = vld [vmem:[#allocation2 + $0x10] sm:$0xff]
    %v89 = vld [vmem:[#allocation2 + $0x18] sm:$0xff]
    %v90 = vld [vmem:[#allocation5] sm:$0xff]
    %v91 = vld [vmem:[#allocation5 + $0x8] sm:$0xff]
    %v92 = vld [vmem:[#allocation5 + $0x10] sm:$0xff]
    %v93 = vld [vmem:[#allocation5 + $0x18] sm:$0xff]
    %v94 = vsub.f32 %v86, %v90
    %v95 = vsub.f32 %v87, %v91
    %v96 = vsub.f32 %v88, %v92
    %v97 = vsub.f32 %v89, %v93
    %v98 = vmul.f32 %v94, %v94
    %v99 = vmul.f32 %v95, %v95
    %v100 = vmul.f32 %v96, %v96
    %v101 = vmul.f32 %v97, %v97
    %s102 = sadd.s32 0, 0
    %s103 = smul.u32 %s102, 8
    %v104 = vlaneseq
    %v105 = vshrl.u32 %v104, 7
    %v106 = vstv %s103
    %v107 = vadd.s32 %v105, %v106
    %vm108 = vcmp.lt.s32.totalorder %v107, 4
    %v113 = vcombine.low %v98, %v100
    %v114 = vcombine.high %v98, %v100
    %v115 = vcombine.low %v99, %v101
    %v116 = vcombine.high %v99, %v101
    %v121 = vsel %vm108, %v113, 0.0
    %v122 = vsel %vm108, %v114, 0.0
    %v123 = vsel %vm108, %v115, 0.0
    %v124 = vsel %vm108, %v116, 0.0
    %v125 = vld [vmem:[#allocation7] sm:$0xff]
    %v126 = vld [vmem:[#allocation7 + $0x8] sm:$0xff]
    %v127 = vld [vmem:[#allocation7 + $0x10] sm:$0xff]
    %v128 = vld [vmem:[#allocation7 + $0x18] sm:$0xff]
    %v129 = vadd.f32 %v121, 0.0
    %v130 = vadd.f32 %v122, 0.0
    %v131 = vadd.f32 %v123, 0.0
    %v132 = vadd.f32 %v124, 0.0
    %v133 = vadd.f32 %v125, %v129
    %v134 = vadd.f32 %v126, %v130
    %v135 = vadd.f32 %v127, %v131
    %v136 = vadd.f32 %v128, %v132
    %137 = vst [vmem:[#allocation7] sm:$0xff] %v133
    %138 = vst [vmem:[#allocation7 + $0x8] sm:$0xff] %v134
    %139 = vst [vmem:[#allocation7 + $0x10] sm:$0xff] %v135
    %140 = vst [vmem:[#allocation7 + $0x18] sm:$0xff] %v136
    // Predicated region
    $region22: #{tpu_custom_call.1} parent=1 // pred_check
      _
    $region23: #{tpu_custom_call.1} parent=1 // pred_check_branch
      %142 = sbr.rel (0) target = $region25
    $region24: #{tpu_custom_call.1} parent=1 // pred_region
      %s144 = ssub.s32 512, 512
      %145 = vsyncadd [#allocation4], %s144
      %s147 = sshll.u32 [#allocation7], 4
      %s148 = int_to_ptr.vmem [resolvable:$true] %s147
      %150 = dma.vmem_to_hbm [thread:$0]  %s148, 512, %s2, [#allocation4]
    $region25: #{tpu_custom_call.1} parent=1 // pred_fallthru
      _
    // Predicated region
    $region26: #{tpu_custom_call.1} parent=1 // pred_check
      _
    $region27: #{tpu_custom_call.1} parent=1 // pred_check_branch
      %152 = sbr.rel (0) target = $region29
    $region28: #{tpu_custom_call.1} parent=1 // pred_region
      %153 = dma.done [#allocation4], 512
    $region29: #{tpu_custom_call.1} parent=1 // pred_fallthru
      _
    %154 = vsyncpa [#allocation3], 1
    %155 = vsyncpa [#allocation6], 1
    %156 = vsyncpa [#allocation4], 1

</llo_original>
